<compile_context>
chip_gen: v7x
topology: tpu7x:2x2x1
jax: 0.10.0
libtpu: 0.0.40
codegen_flags: <defaults>
</compile_context>

<pallas_src>
import functools

import jax
import jax.numpy as jnp
from jax.experimental import pallas as pl
from jax.experimental.pallas import tpu as pltpu


def _normed_linear_kernel(x_ref, w_ref, inv_x_ref, inv_w_ref, o_ref, *scratch,
                          cast_bf16, precision):
    # If no scratch was allocated the output (f32) doubles as the accumulator:
    # its block index ignores k, so it stays resident in VMEM across the K loop.
    acc_ref = scratch[0] if scratch else o_ref
    k = pl.program_id(2)

    @pl.when(k == 0)
    def _():
        acc_ref[...] = jnp.zeros_like(acc_ref)

    x = x_ref[...]                      # [tm, tk]
    w = w_ref[...]                      # [tk, tn]
    if cast_bf16:
        x = x.astype(jnp.bfloat16)
        w = w.astype(jnp.bfloat16)

    acc_ref[...] += jnp.dot(x, w, preferred_element_type=jnp.float32,
                            precision=precision)

    @pl.when(k == pl.num_programs(2) - 1)
    def _():
        # Rank-1 rescale with the hoisted normalization vectors.
        o_ref[...] = (acc_ref[...] * inv_x_ref[...] * inv_w_ref[...]).astype(o_ref.dtype)


def _round_up(v: int, m: int) -> int:
    return ((v + m - 1) // m) * m


def _sublane_multiple(dtype) -> int:
    # 8 for 4-byte, 16 for 2-byte, 32 for 1-byte dtypes.
    return max(8, 32 // jnp.dtype(dtype).itemsize)


@functools.partial(jax.jit, static_argnames=("tm", "tn", "tk", "mxu_bf16"))
def normed_linear(x: jax.Array, weight: jax.Array, *, tm: int = 512,
                  tn: int = 512, tk: int = 1024,
                  mxu_bf16: bool = False) -> jax.Array:
    """out = normalize(x, dim=1) @ normalize(weight, dim=0)."""
    n, f_in = x.shape
    f_in_w, f_out = weight.shape
    assert f_in == f_in_w, "in_features mismatch between x and weight"
    out_dtype = x.dtype

    # ---- Hoisted normalization (computed once, not per grid step). --------
    # F.normalize: x / max(||x||, 1e-12)  ==  x * rsqrt(max(||x||^2, 1e-24)).
    eps_sq = jnp.float32(1e-24)
    x32 = x.astype(jnp.float32)
    w32 = weight.astype(jnp.float32)
    inv_x = jax.lax.rsqrt(
        jnp.maximum(jnp.sum(x32 * x32, axis=1, keepdims=True), eps_sq))   # [n, 1]
    inv_w = jax.lax.rsqrt(
        jnp.maximum(jnp.sum(w32 * w32, axis=0, keepdims=True), eps_sq))   # [1, f_out]

    # ---- Tile clamping (TPU-legal, dtype-aware sublane rounding). ----------
    sub = _sublane_multiple(x.dtype)
    tm = min(tm, _round_up(n, sub))
    tk = min(tk, _round_up(f_in, 128))
    tn = min(tn, _round_up(f_out, 128))

    n_p = _round_up(n, tm)
    k_p = _round_up(f_in, tk)
    m_p = _round_up(f_out, tn)

    # Megacore (v7x, 2 TCs): expose >= 2 parallel blocks when possible.
    if (n_p // tm) * (m_p // tn) < 2:
        if tn % 256 == 0:
            tn //= 2
        elif tm >= 2 * sub and tm % (2 * sub) == 0:
            tm //= 2

    # ---- Padding (skipped when already aligned). ---------------------------
    if (n_p, k_p) != (n, f_in):
        x = jnp.pad(x, ((0, n_p - n), (0, k_p - f_in)))
    if (k_p, m_p) != (f_in, f_out):
        weight = jnp.pad(weight, ((0, k_p - f_in), (0, m_p - f_out)))
    if n_p != n:
        inv_x = jnp.pad(inv_x, ((0, n_p - n), (0, 0)))
    if m_p != f_out:
        inv_w = jnp.pad(inv_w, ((0, 0), (0, m_p - f_out)))

    grid = (n_p // tm, m_p // tn, k_p // tk)

    out_is_f32 = out_dtype == jnp.float32
    scratch_shapes = [] if out_is_f32 else [pltpu.VMEM((tm, tn), jnp.float32)]

    cast_bf16 = bool(mxu_bf16) and x.dtype == jnp.float32
    precision = (None if (cast_bf16 or x.dtype != jnp.float32)
                 else jax.lax.Precision.HIGHEST)

    # ---- VMEM budget (double-buffered operands + output + optional acc). ---
    in_b = jnp.dtype(x.dtype).itemsize
    out_b = jnp.dtype(out_dtype).itemsize
    vmem_need = (2 * (tm * tk + tk * tn) * in_b        # operand tiles, 2 buffers each
                 + 2 * tm * tn * out_b                 # output tile, 2 buffers
                 + (0 if out_is_f32 else tm * tn * 4)  # f32 accumulator scratch
                 + 4 * (tm + tn) * 4)                  # inv vectors (tiny)
    vmem_limit = int(min(max(int(vmem_need * 1.3) + (2 << 20), 16 << 20), 48 << 20))

    kernel = functools.partial(_normed_linear_kernel,
                               cast_bf16=cast_bf16, precision=precision)

    out = pl.pallas_call(
        kernel,
        out_shape=jax.ShapeDtypeStruct((n_p, m_p), out_dtype),
        grid_spec=pltpu.PrefetchScalarGridSpec(
            num_scalar_prefetch=0,
            grid=grid,
            in_specs=[
                pl.BlockSpec((tm, tk), lambda i, j, k: (i, k)),
                pl.BlockSpec((tk, tn), lambda i, j, k: (k, j)),
                pl.BlockSpec((tm, 1), lambda i, j, k: (i, 0)),
                pl.BlockSpec((1, tn), lambda i, j, k: (0, j)),
            ],
            out_specs=pl.BlockSpec((tm, tn), lambda i, j, k: (i, j)),
            scratch_shapes=scratch_shapes,
        ),
        compiler_params=pltpu.CompilerParams(
            dimension_semantics=("parallel", "parallel", "arbitrary"),
            vmem_limit_bytes=vmem_limit,
        ),
    )(x, weight, inv_x, inv_w)

    return out[:n, :f_out]


def init_normed_linear_weight(key, in_features, out_features):
    """Mimic: Tensor(in,out).uniform_(-1,1).renorm_(2, 1, 1e-5).mul_(1e5).

    renorm over dim=1 clamps each column's L2 norm to 1e-5; *1e5 then gives
    (approximately) unit-norm columns.
    """
    w = jax.random.uniform(
        key, (in_features, out_features), minval=-1.0, maxval=1.0,
        dtype=jnp.float32,
    )
    col_norm = jnp.sqrt(jnp.sum(w * w, axis=0, keepdims=True))
    scale = jnp.where(col_norm > 1e-5, 1.0 / jnp.maximum(col_norm, 1e-12), 1e5)
    return w * scale


def normed_linear_ref(x, weight):
    eps = 1e-12
    xn = x / jnp.maximum(jnp.linalg.norm(x, axis=1, keepdims=True), eps)
    wn = weight / jnp.maximum(jnp.linalg.norm(weight, axis=0, keepdims=True), eps)
    return xn @ wn


if __name__ == "__main__":
    key = jax.random.PRNGKey(0)
    k_x, k_w = jax.random.split(key)

    batch = 8
    in_features = 32
    out_features = 16

    x = jax.random.normal(k_x, (batch, in_features), dtype=jnp.float32)
    weight = init_normed_linear_weight(k_w, in_features, out_features)

    ref = normed_linear_ref(x, weight)

    # Exact-f32 path (MXU precision=HIGHEST).
    out = jax.block_until_ready(normed_linear(x, weight))
    assert out.shape == (batch, out_features)
    assert jnp.allclose(out, ref, atol=1e-5, rtol=1e-5), "mismatch vs reference (f32 path)"

    # bf16-MXU fast path (perf-review recommendation): looser tolerance.
    out_bf16 = jax.block_until_ready(normed_linear(x, weight, mxu_bf16=True))
    assert jnp.allclose(out_bf16, ref, atol=5e-2, rtol=5e-2), "mismatch vs reference (bf16 path)"

    print("KERNEL_OK")
</pallas_src>

<mosaic_0001>
module attributes {stable_mosaic.version = 11 : i64} {
  func.func @_normed_linear_kernel(%arg0: i32, %arg1: i32, %arg2: i32, %arg3: memref<8x128xf32, #tpu.memory_space<vmem>>, %arg4: memref<128x128xf32, #tpu.memory_space<vmem>>, %arg5: memref<8x1xf32, #tpu.memory_space<vmem>>, %arg6: memref<1x128xf32, #tpu.memory_space<vmem>>, %arg7: memref<8x128xf32, #tpu.memory_space<vmem>>) attributes {dimension_semantics = [#tpu.dimension_semantics<parallel>, #tpu.dimension_semantics<parallel>, #tpu.dimension_semantics<arbitrary>], iteration_bounds = array<i64: 1, 1, 1>, scalar_prefetch = 0 : i64, scratch_operands = 0 : i64, tpu.core_type = #tpu.core_type<tc>, window_params = [{transform_indices = @transform_0, window_bounds = array<i64: 8, 128>}, {transform_indices = @transform_1, window_bounds = array<i64: 128, 128>}, {transform_indices = @transform_2, window_bounds = array<i64: 8, 1>}, {transform_indices = @transform_3, window_bounds = array<i64: 1, 128>}, {transform_indices = @transform_4, window_bounds = array<i64: 8, 128>}]} {
    %c0_i32 = arith.constant 0 : i32
    %0 = arith.cmpi eq, %arg2, %c0_i32 : i32
    %1 = arith.extui %0 : i1 to i32
    %c0_i32_0 = arith.constant 0 : i32
    %2 = arith.cmpi ne, %1, %c0_i32_0 : i32
    scf.if %2 {
      %cst_10 = arith.constant 0.000000e+00 : f32
      %12 = vector.broadcast %cst_10 : f32 to vector<8x128xf32>
      %c0_11 = arith.constant 0 : index
      %c0_12 = arith.constant 0 : index
      %13 = vector.load %arg7[%c0_11, %c0_12] : memref<8x128xf32, #tpu.memory_space<vmem>>, vector<8x128xf32>
      tpu.vector_store %arg7[%c0_11, %c0_12], %12 {strides = array<i32>} : memref<8x128xf32, #tpu.memory_space<vmem>>, vector<8x128xf32>,
    } else {
    }
    %c0 = arith.constant 0 : index
    %c0_1 = arith.constant 0 : index
    %3 = vector.load %arg3[%c0, %c0_1] : memref<8x128xf32, #tpu.memory_space<vmem>>, vector<8x128xf32>
    %c0_2 = arith.constant 0 : index
    %c0_3 = arith.constant 0 : index
    %4 = vector.load %arg4[%c0_2, %c0_3] : memref<128x128xf32, #tpu.memory_space<vmem>>, vector<128x128xf32>
    %c0_4 = arith.constant 0 : index
    %c0_5 = arith.constant 0 : index
    %5 = vector.load %arg7[%c0_4, %c0_5] : memref<8x128xf32, #tpu.memory_space<vmem>>, vector<8x128xf32>
    %cst = arith.constant dense<0.000000e+00> : vector<8x128xf32>
    %6 = tpu.matmul %3, %4, %cst {dimension_numbers = #tpu.dot_dimension_numbers<[1], [0], [0], [1], [0, 0, 1, 1], [], []>, precision = #tpu.contract_precision<fp32>} : vector<8x128xf32>, vector<128x128xf32>, vector<8x128xf32> -> vector<8x128xf32>
    %7 = arith.addf %5, %6 : vector<8x128xf32>
    %c0_6 = arith.constant 0 : index
    %c0_7 = arith.constant 0 : index
    %8 = vector.load %arg7[%c0_6, %c0_7] : memref<8x128xf32, #tpu.memory_space<vmem>>, vector<8x128xf32>
    tpu.vector_store %arg7[%c0_6, %c0_7], %7 {strides = array<i32>} : memref<8x128xf32, #tpu.memory_space<vmem>>, vector<8x128xf32>,
    %c0_i32_8 = arith.constant 0 : i32
    %9 = arith.cmpi eq, %arg2, %c0_i32_8 : i32
    %10 = arith.extui %9 : i1 to i32
    %c0_i32_9 = arith.constant 0 : i32
    %11 = arith.cmpi ne, %10, %c0_i32_9 : i32
    scf.if %11 {
      %c0_10 = arith.constant 0 : index
      %c0_11 = arith.constant 0 : index
      %12 = vector.load %arg7[%c0_10, %c0_11] : memref<8x128xf32, #tpu.memory_space<vmem>>, vector<8x128xf32>
      %c0_12 = arith.constant 0 : index
      %c0_13 = arith.constant 0 : index
      %13 = vector.load %arg5[%c0_12, %c0_13] : memref<8x1xf32, #tpu.memory_space<vmem>>, vector<8x1xf32>
      %14 = vector.broadcast %13 : vector<8x1xf32> to vector<8x128xf32>
      %15 = arith.mulf %12, %14 : vector<8x128xf32>
      %c0_14 = arith.constant 0 : index
      %c0_15 = arith.constant 0 : index
      %16 = vector.load %arg6[%c0_14, %c0_15] : memref<1x128xf32, #tpu.memory_space<vmem>>, vector<1x128xf32>
      %17 = vector.broadcast %16 : vector<1x128xf32> to vector<8x128xf32>
      %18 = arith.mulf %15, %17 : vector<8x128xf32>
      %c0_16 = arith.constant 0 : index
      %c0_17 = arith.constant 0 : index
      %19 = vector.load %arg7[%c0_16, %c0_17] : memref<8x128xf32, #tpu.memory_space<vmem>>, vector<8x128xf32>
      tpu.vector_store %arg7[%c0_16, %c0_17], %18 {strides = array<i32>} : memref<8x128xf32, #tpu.memory_space<vmem>>, vector<8x128xf32>,
    } else {
    }
    return
  }
  func.func @transform_0(%arg0: i32, %arg1: i32, %arg2: i32) -> (i32, i32) {
    %c0_i32 = arith.constant 0 : i32
    return %arg0, %arg2 : i32, i32
  }
  func.func @transform_1(%arg0: i32, %arg1: i32, %arg2: i32) -> (i32, i32) {
    %c0_i32 = arith.constant 0 : i32
    return %arg2, %arg1 : i32, i32
  }
  func.func @transform_2(%arg0: i32, %arg1: i32, %arg2: i32) -> (i32, i32) {
    %c0_i32 = arith.constant 0 : i32
    %c0_i32_0 = arith.constant 0 : i32
    return %arg0, %c0_i32 : i32, i32
  }
  func.func @transform_3(%arg0: i32, %arg1: i32, %arg2: i32) -> (i32, i32) {
    %c0_i32 = arith.constant 0 : i32
    %c0_i32_0 = arith.constant 0 : i32
    return %c0_i32, %arg1 : i32, i32
  }
  func.func @transform_4(%arg0: i32, %arg1: i32, %arg2: i32) -> (i32, i32) {
    %c0_i32 = arith.constant 0 : i32
    return %arg0, %arg1 : i32, i32
  }
}

</mosaic_0001>

<llo_original>
// kernel: normed_linear.1
$region0: #{normed_linear.1}
  #allocation0 [shape = 'u32[]', space=smem, size = 0x4, offset = 0x4, fixed_abs, tag = 'smem constant byte address 0x4 - core index']
  #allocation1 [shape = 'u32[144,128]{1,0:T(1,128)}', space=vmem, size = 0x12000, scoped, tag = 'internal scratch']
  %s0 = inlined_call_operand.vmem [shape: f32[8,128], index: 0, kind: input, shape index: {}]
  %s1 = inlined_call_operand.vmem [shape: f32[128,128], index: 1, kind: input, shape index: {}]
  %s2 = inlined_call_operand.vmem [shape: f32[8,1], index: 2, kind: input, shape index: {}]
  %s3 = inlined_call_operand.vmem [shape: f32[1,128], index: 3, kind: input, shape index: {}]
  %s4 = inlined_call_operand.hbm [shape: f32[8,128], index: 4, kind: output, shape index: {}]
  %s5 = sld [smem:[#allocation0]]
  $region34: #{normed_linear.1} parent=0
    _
  %s7 = ssub.s32 1, %s5
  %s8 = scalar_select 0, %s7, %s5
  $region1: #{normed_linear.1} parent=0
    #allocation2 [shape = 'u8[4096]{0}', space=vmem, size = 0x1000, scoped, tag = 'output window, operand 0, single buffered']
    #allocation3 [shape = 's32[1]{0}', space=sflag, size = 0x4, scoped, tag = 'scoped memory for normed_linear.1']
    %9 = vsyncpa [#allocation3], 0
    // Predicated region
    $region2: #{normed_linear.1} parent=1 // pred_check
      _
    $region3: #{normed_linear.1} parent=1 // pred_check_branch
      %11 = sbr.rel (0) target = $region5
    $region4: #{normed_linear.1} parent=1 // pred_region
      _
    $region5: #{normed_linear.1} parent=1 // pred_fallthru
      _
    // Predicated region
    $region6: #{normed_linear.1} parent=1 // pred_check
      _
    $region7: #{normed_linear.1} parent=1 // pred_check_branch
      %13 = sbr.rel (0) target = $region9
    $region8: #{normed_linear.1} parent=1 // pred_region
      _
    $region9: #{normed_linear.1} parent=1 // pred_fallthru
      _
    // Predicated region
    $region10: #{normed_linear.1} parent=1 // pred_check
      _
    $region11: #{normed_linear.1} parent=1 // pred_check_branch
      %15 = sbr.rel (0) target = $region13
    $region12: #{normed_linear.1} parent=1 // pred_region
      _
    $region13: #{normed_linear.1} parent=1 // pred_fallthru
      _
    // Predicated region
    $region14: #{normed_linear.1} parent=1 // pred_check
      _
    $region15: #{normed_linear.1} parent=1 // pred_check_branch
      %17 = sbr.rel (0) target = $region17
    $region16: #{normed_linear.1} parent=1 // pred_region
      _
    $region17: #{normed_linear.1} parent=1 // pred_fallthru
      _
    %p18 = scmp.eq.s32.totalorder 0, 0
    // Predicated region
    $region18: #{normed_linear.1} parent=1 // pred_check
      %p19 = pneg %p18
    $region19: #{normed_linear.1} parent=1 // pred_check_branch
      %21 = sbr.rel (%p19) target = $region21
    $region20: #{normed_linear.1} parent=1 // pred_region
      %22 = vst [vmem:[#allocation2] sm:$0xff] 0.0
    $region21: #{normed_linear.1} parent=1 // pred_fallthru
      _
    %v23 = vld [vmem:[%s0] sm:$0xff]
    %v24 = vld [vmem:[%s1] sm:$0xff]
    %v25 = vld [vmem:[%s1 + $0x8] sm:$0xff]
    %v26 = vld [vmem:[%s1 + $0x10] sm:$0xff]
    %v27 = vld [vmem:[%s1 + $0x18] sm:$0xff]
    %v28 = vld [vmem:[%s1 + $0x20] sm:$0xff]
    %v29 = vld [vmem:[%s1 + $0x28] sm:$0xff]
    %v30 = vld [vmem:[%s1 + $0x30] sm:$0xff]
    %v31 = vld [vmem:[%s1 + $0x38] sm:$0xff]
    %v32 = vld [vmem:[%s1 + $0x40] sm:$0xff]
    %v33 = vld [vmem:[%s1 + $0x48] sm:$0xff]
    %v34 = vld [vmem:[%s1 + $0x50] sm:$0xff]
    %v35 = vld [vmem:[%s1 + $0x58] sm:$0xff]
    %v36 = vld [vmem:[%s1 + $0x60] sm:$0xff]
    %v37 = vld [vmem:[%s1 + $0x68] sm:$0xff]
    %v38 = vld [vmem:[%s1 + $0x70] sm:$0xff]
    %v39 = vld [vmem:[%s1 + $0x78] sm:$0xff]
    %v40 = vld [vmem:[#allocation2] sm:$0xff]
    %41 = vmatprep.subr.mxu0 0.0
    %v42 = vand.u32 %v24, 4294901760
    %43 = vmatpush1.msra.mxu0 %v42
    %44 = vmatprep.subr.mxu0 0.0
    %v45 = vand.u32 %v25, 4294901760
    %46 = vmatpush1.msra.mxu0 %v45
    %47 = vmatprep.subr.mxu0 0.0
    %v48 = vand.u32 %v26, 4294901760
    %49 = vmatpush1.msra.mxu0 %v48
    %50 = vmatprep.subr.mxu0 0.0
    %v51 = vand.u32 %v27, 4294901760
    %52 = vmatpush1.msra.mxu0 %v51
    %53 = vmatprep.subr.mxu0 0.0
    %v54 = vand.u32 %v28, 4294901760
    %55 = vmatpush1.msra.mxu0 %v54
    %56 = vmatprep.subr.mxu0 0.0
    %v57 = vand.u32 %v29, 4294901760
    %58 = vmatpush1.msra.mxu0 %v57
    %59 = vmatprep.subr.mxu0 0.0
    %v60 = vand.u32 %v30, 4294901760
    %61 = vmatpush1.msra.mxu0 %v60
    %62 = vmatprep.subr.mxu0 0.0
    %v63 = vand.u32 %v31, 4294901760
    %64 = vmatpush1.msra.mxu0 %v63
    %65 = vmatprep.subr.mxu0 0.0
    %v66 = vand.u32 %v32, 4294901760
    %67 = vmatpush1.msra.mxu0 %v66
    %68 = vmatprep.subr.mxu0 0.0
    %v69 = vand.u32 %v33, 4294901760
    %70 = vmatpush1.msra.mxu0 %v69
    %71 = vmatprep.subr.mxu0 0.0
    %v72 = vand.u32 %v34, 4294901760
    %73 = vmatpush1.msra.mxu0 %v72
    %74 = vmatprep.subr.mxu0 0.0
    %v75 = vand.u32 %v35, 4294901760
    %76 = vmatpush1.msra.mxu0 %v75
    %77 = vmatprep.subr.mxu0 0.0
    %v78 = vand.u32 %v36, 4294901760
    %79 = vmatpush1.msra.mxu0 %v78
    %80 = vmatprep.subr.mxu0 0.0
    %v81 = vand.u32 %v37, 4294901760
    %82 = vmatpush1.msra.mxu0 %v81
    %83 = vmatprep.subr.mxu0 0.0
    %v84 = vand.u32 %v38, 4294901760
    %85 = vmatpush1.msra.mxu0 %v84
    %86 = vmatprep.subr.mxu0 0.0
    %v87 = vand.u32 %v39, 4294901760
    %88 = vmatpush1.msra.mxu0 %v87
    %89 = vmatprep.subr.mxu0 0.0
    %90 = vmatpush1.msra.mxu0 0.0
    %91 = vmatprep.subr.mxu0 0.0
    %92 = vmatpush1.msra.mxu0 0.0
    %93 = vmatprep.subr.mxu0 0.0
    %94 = vmatpush1.msra.mxu0 0.0
    %95 = vmatprep.subr.mxu0 0.0
    %96 = vmatpush1.msra.mxu0 0.0
    %97 = vmatprep.subr.mxu0 0.0
    %98 = vmatpush1.msra.mxu0 0.0
    %99 = vmatprep.subr.mxu0 0.0
    %100 = vmatpush1.msra.mxu0 0.0
    %101 = vmatprep.subr.mxu0 0.0
    %102 = vmatpush1.msra.mxu0 0.0
    %103 = vmatprep.subr.mxu0 0.0
    %104 = vmatpush1.msra.mxu0 0.0
    %105 = vmatprep.subr.mxu0 0.0
    %106 = vmatpush1.msra.mxu0 0.0
    %107 = vmatprep.subr.mxu0 0.0
    %108 = vmatpush1.msra.mxu0 0.0
    %109 = vmatprep.subr.mxu0 0.0
    %110 = vmatpush1.msra.mxu0 0.0
    %111 = vmatprep.subr.mxu0 0.0
    %112 = vmatpush1.msra.mxu0 0.0
    %113 = vmatprep.subr.mxu0 0.0
    %114 = vmatpush1.msra.mxu0 0.0
    %115 = vmatprep.subr.mxu0 0.0
    %116 = vmatpush1.msra.mxu0 0.0
    %117 = vmatprep.subr.mxu0 0.0
    %118 = vmatpush1.msra.mxu0 0.0
    %119 = vmatprep.subr.mxu0 0.0
    %120 = vmatpush1.msra.mxu0 0.0
    %121 = vmatprep.mubr.f32.mxu0 0.0
    %v122 = vand.u32 %v23, 4294901760
    %v123 = vsub.f32 %v23, %v122
    %v124 = vand.u32 %v123, 4294901760
    %v125 = vsub.f32 %v123, %v124
    %v126 = vand.u32 %v125, 4294901760
    %127 = vmatmul.mubr.f32.gmra.mrb[0].mxu0 %v126
    %v128 = vpop.f32.mrb[0].mxu0
    %v129 = vadd.f32 0.0, %v128
    %v130 = vpop.f32.mrb[0].mxu0
    %131 = vdwg.mxu0
    %132 = vmatprep.subr.mxu0 0.0
    %v133 = vand.u32 %v24, 4294901760
    %v134 = vsub.f32 %v24, %v133
    %v135 = vand.u32 %v134, 4294901760
    %v136 = vsub.f32 %v134, %v135
    %v137 = vand.u32 %v136, 4294901760
    %138 = vmatpush1.msra.mxu0 %v137
    %139 = vmatprep.subr.mxu0 0.0
    %v140 = vand.u32 %v25, 4294901760
    %v141 = vsub.f32 %v25, %v140
    %v142 = vand.u32 %v141, 4294901760
    %v143 = vsub.f32 %v141, %v142
    %v144 = vand.u32 %v143, 4294901760
    %145 = vmatpush1.msra.mxu0 %v144
    %146 = vmatprep.subr.mxu0 0.0
    %v147 = vand.u32 %v26, 4294901760
    %v148 = vsub.f32 %v26, %v147
    %v149 = vand.u32 %v148, 4294901760
    %v150 = vsub.f32 %v148, %v149
    %v151 = vand.u32 %v150, 4294901760
    %152 = vmatpush1.msra.mxu0 %v151
    %153 = vmatprep.subr.mxu0 0.0
    %v154 = vand.u32 %v27, 4294901760
    %v155 = vsub.f32 %v27, %v154
    %v156 = vand.u32 %v155, 4294901760
    %v157 = vsub.f32 %v155, %v156
    %v158 = vand.u32 %v157, 4294901760
    %159 = vmatpush1.msra.mxu0 %v158
    %160 = vmatprep.subr.mxu0 0.0
    %v161 = vand.u32 %v28, 4294901760
    %v162 = vsub.f32 %v28, %v161
    %v163 = vand.u32 %v162, 4294901760
    %v164 = vsub.f32 %v162, %v163
    %v165 = vand.u32 %v164, 4294901760
    %166 = vmatpush1.msra.mxu0 %v165
    %167 = vmatprep.subr.mxu0 0.0
    %v168 = vand.u32 %v29, 4294901760
    %v169 = vsub.f32 %v29, %v168
    %v170 = vand.u32 %v169, 4294901760
    %v171 = vsub.f32 %v169, %v170
    %v172 = vand.u32 %v171, 4294901760
    %173 = vmatpush1.msra.mxu0 %v172
    %174 = vmatprep.subr.mxu0 0.0
    %v175 = vand.u32 %v30, 4294901760
    %v176 = vsub.f32 %v30, %v175
    %v177 = vand.u32 %v176, 4294901760
    %v178 = vsub.f32 %v176, %v177
    %v179 = vand.u32 %v178, 4294901760
    %180 = vmatpush1.msra.mxu0 %v179
    %181 = vmatprep.subr.mxu0 0.0
    %v182 = vand.u32 %v31, 4294901760
    %v183 = vsub.f32 %v31, %v182
    %v184 = vand.u32 %v183, 4294901760
    %v185 = vsub.f32 %v183, %v184
    %v186 = vand.u32 %v185, 4294901760
    %187 = vmatpush1.msra.mxu0 %v186
    %188 = vmatprep.subr.mxu0 0.0
    %v189 = vand.u32 %v32, 4294901760
    %v190 = vsub.f32 %v32, %v189
    %v191 = vand.u32 %v190, 4294901760
    %v192 = vsub.f32 %v190, %v191
    %v193 = vand.u32 %v192, 4294901760
    %194 = vmatpush1.msra.mxu0 %v193
    %195 = vmatprep.subr.mxu0 0.0
    %v196 = vand.u32 %v33, 4294901760
    %v197 = vsub.f32 %v33, %v196
    %v198 = vand.u32 %v197, 4294901760
    %v199 = vsub.f32 %v197, %v198
    %v200 = vand.u32 %v199, 4294901760
    %201 = vmatpush1.msra.mxu0 %v200
    %202 = vmatprep.subr.mxu0 0.0
    %v203 = vand.u32 %v34, 4294901760
    %v204 = vsub.f32 %v34, %v203
    %v205 = vand.u32 %v204, 4294901760
    %v206 = vsub.f32 %v204, %v205
    %v207 = vand.u32 %v206, 4294901760
    %208 = vmatpush1.msra.mxu0 %v207
    %209 = vmatprep.subr.mxu0 0.0
    %v210 = vand.u32 %v35, 4294901760
    %v211 = vsub.f32 %v35, %v210
    %v212 = vand.u32 %v211, 4294901760
    %v213 = vsub.f32 %v211, %v212
    %v214 = vand.u32 %v213, 4294901760
    %215 = vmatpush1.msra.mxu0 %v214
    %216 = vmatprep.subr.mxu0 0.0
    %v217 = vand.u32 %v36, 4294901760
    %v218 = vsub.f32 %v36, %v217
    %v219 = vand.u32 %v218, 4294901760
    %v220 = vsub.f32 %v218, %v219
    %v221 = vand.u32 %v220, 4294901760
    %222 = vmatpush1.msra.mxu0 %v221
    %223 = vmatprep.subr.mxu0 0.0
    %v224 = vand.u32 %v37, 4294901760
    %v225 = vsub.f32 %v37, %v224
    %v226 = vand.u32 %v225, 4294901760
    %v227 = vsub.f32 %v225, %v226
    %v228 = vand.u32 %v227, 4294901760
    %229 = vmatpush1.msra.mxu0 %v228
    %230 = vmatprep.subr.mxu0 0.0
    %v231 = vand.u32 %v38, 4294901760
    %v232 = vsub.f32 %v38, %v231
    %v233 = vand.u32 %v232, 4294901760
    %v234 = vsub.f32 %v232, %v233
    %v235 = vand.u32 %v234, 4294901760
    %236 = vmatpush1.msra.mxu0 %v235
    %237 = vmatprep.subr.mxu0 0.0
    %v238 = vand.u32 %v39, 4294901760
    %v239 = vsub.f32 %v39, %v238
    %v240 = vand.u32 %v239, 4294901760
    %v241 = vsub.f32 %v239, %v240
    %v242 = vand.u32 %v241, 4294901760
    %243 = vmatpush1.msra.mxu0 %v242
    %244 = vmatprep.subr.mxu0 0.0
    %245 = vmatpush1.msra.mxu0 0.0
    %246 = vmatprep.subr.mxu0 0.0
    %247 = vmatpush1.msra.mxu0 0.0
    %248 = vmatprep.subr.mxu0 0.0
    %249 = vmatpush1.msra.mxu0 0.0
    %250 = vmatprep.subr.mxu0 0.0
    %251 = vmatpush1.msra.mxu0 0.0
    %252 = vmatprep.subr.mxu0 0.0
    %253 = vmatpush1.msra.mxu0 0.0
    %254 = vmatprep.subr.mxu0 0.0
    %255 = vmatpush1.msra.mxu0 0.0
    %256 = vmatprep.subr.mxu0 0.0
    %257 = vmatpush1.msra.mxu0 0.0
    %258 = vmatprep.subr.mxu0 0.0
    %259 = vmatpush1.msra.mxu0 0.0
    %260 = vmatprep.subr.mxu0 0.0
    %261 = vmatpush1.msra.mxu0 0.0
    %262 = vmatprep.subr.mxu0 0.0
    %263 = vmatpush1.msra.mxu0 0.0
    %264 = vmatprep.subr.mxu0 0.0
    %265 = vmatpush1.msra.mxu0 0.0
    %266 = vmatprep.subr.mxu0 0.0
    %267 = vmatpush1.msra.mxu0 0.0
    %268 = vmatprep.subr.mxu0 0.0
    %269 = vmatpush1.msra.mxu0 0.0
    %270 = vmatprep.subr.mxu0 0.0
    %271 = vmatpush1.msra.mxu0 0.0
    %272 = vmatprep.subr.mxu0 0.0
    %273 = vmatpush1.msra.mxu0 0.0
    %274 = vmatprep.subr.mxu0 0.0
    %275 = vmatpush1.msra.mxu0 0.0
    %276 = vmatprep.mubr.f32.mxu0 0.0
    %v277 = vand.u32 %v23, 4294901760
    %278 = vmatmul.mubr.f32.gmra.mrb[0].mxu0 %v277
    %v279 = vpop.f32.mrb[0].mxu0
    %v280 = vadd.f32 %v129, %v279
    %v281 = vpop.f32.mrb[0].mxu0
    %282 = vdwg.mxu0
    %283 = vmatprep.subr.mxu0 0.0
    %v284 = vand.u32 %v24, 4294901760
    %v285 = vsub.f32 %v24, %v284
    %286 = vmatpush1.msra.mxu0 %v285
    %287 = vmatprep.subr.mxu0 0.0
    %v288 = vand.u32 %v25, 4294901760
    %v289 = vsub.f32 %v25, %v288
    %290 = vmatpush1.msra.mxu0 %v289
    %291 = vmatprep.subr.mxu0 0.0
    %v292 = vand.u32 %v26, 4294901760
    %v293 = vsub.f32 %v26, %v292
    %294 = vmatpush1.msra.mxu0 %v293
    %295 = vmatprep.subr.mxu0 0.0
    %v296 = vand.u32 %v27, 4294901760
    %v297 = vsub.f32 %v27, %v296
    %298 = vmatpush1.msra.mxu0 %v297
    %299 = vmatprep.subr.mxu0 0.0
    %v300 = vand.u32 %v28, 4294901760
    %v301 = vsub.f32 %v28, %v300
    %302 = vmatpush1.msra.mxu0 %v301
    %303 = vmatprep.subr.mxu0 0.0
    %v304 = vand.u32 %v29, 4294901760
    %v305 = vsub.f32 %v29, %v304
    %306 = vmatpush1.msra.mxu0 %v305
    %307 = vmatprep.subr.mxu0 0.0
    %v308 = vand.u32 %v30, 4294901760
    %v309 = vsub.f32 %v30, %v308
    %310 = vmatpush1.msra.mxu0 %v309
    %311 = vmatprep.subr.mxu0 0.0
    %v312 = vand.u32 %v31, 4294901760
    %v313 = vsub.f32 %v31, %v312
    %314 = vmatpush1.msra.mxu0 %v313
    %315 = vmatprep.subr.mxu0 0.0
    %v316 = vand.u32 %v32, 4294901760
    %v317 = vsub.f32 %v32, %v316
    %318 = vmatpush1.msra.mxu0 %v317
    %319 = vmatprep.subr.mxu0 0.0
    %v320 = vand.u32 %v33, 4294901760
    %v321 = vsub.f32 %v33, %v320
    %322 = vmatpush1.msra.mxu0 %v321
    %323 = vmatprep.subr.mxu0 0.0
    %v324 = vand.u32 %v34, 4294901760
    %v325 = vsub.f32 %v34, %v324
    %326 = vmatpush1.msra.mxu0 %v325
    %327 = vmatprep.subr.mxu0 0.0
    %v328 = vand.u32 %v35, 4294901760
    %v329 = vsub.f32 %v35, %v328
    %330 = vmatpush1.msra.mxu0 %v329
    %331 = vmatprep.subr.mxu0 0.0
    %v332 = vand.u32 %v36, 4294901760
    %v333 = vsub.f32 %v36, %v332
    %334 = vmatpush1.msra.mxu0 %v333
    %335 = vmatprep.subr.mxu0 0.0
    %v336 = vand.u32 %v37, 4294901760
    %v337 = vsub.f32 %v37, %v336
    %338 = vmatpush1.msra.mxu0 %v337
    %339 = vmatprep.subr.mxu0 0.0
    %v340 = vand.u32 %v38, 4294901760
    %v341 = vsub.f32 %v38, %v340
    %342 = vmatpush1.msra.mxu0 %v341
    %343 = vmatprep.subr.mxu0 0.0
    %v344 = vand.u32 %v39, 4294901760
    %v345 = vsub.f32 %v39, %v344
    %346 = vmatpush1.msra.mxu0 %v345
    %347 = vmatprep.subr.mxu0 0.0
    %348 = vmatpush1.msra.mxu0 0.0
    %349 = vmatprep.subr.mxu0 0.0
    %350 = vmatpush1.msra.mxu0 0.0
    %351 = vmatprep.subr.mxu0 0.0
    %352 = vmatpush1.msra.mxu0 0.0
    %353 = vmatprep.subr.mxu0 0.0
    %354 = vmatpush1.msra.mxu0 0.0
    %355 = vmatprep.subr.mxu0 0.0
    %356 = vmatpush1.msra.mxu0 0.0
    %357 = vmatprep.subr.mxu0 0.0
    %358 = vmatpush1.msra.mxu0 0.0
    %359 = vmatprep.subr.mxu0 0.0
    %360 = vmatpush1.msra.mxu0 0.0
    %361 = vmatprep.subr.mxu0 0.0
    %362 = vmatpush1.msra.mxu0 0.0
    %363 = vmatprep.subr.mxu0 0.0
    %364 = vmatpush1.msra.mxu0 0.0
    %365 = vmatprep.subr.mxu0 0.0
    %366 = vmatpush1.msra.mxu0 0.0
    %367 = vmatprep.subr.mxu0 0.0
    %368 = vmatpush1.msra.mxu0 0.0
    %369 = vmatprep.subr.mxu0 0.0
    %370 = vmatpush1.msra.mxu0 0.0
    %371 = vmatprep.subr.mxu0 0.0
    %372 = vmatpush1.msra.mxu0 0.0
    %373 = vmatprep.subr.mxu0 0.0
    %374 = vmatpush1.msra.mxu0 0.0
    %375 = vmatprep.subr.mxu0 0.0
    %376 = vmatpush1.msra.mxu0 0.0
    %377 = vmatprep.subr.mxu0 0.0
    %378 = vmatpush1.msra.mxu0 0.0
    %379 = vmatprep.mubr.f32.mxu0 0.0
    %v380 = vand.u32 %v23, 4294901760
    %v381 = vsub.f32 %v23, %v380
    %382 = vmatmul.mubr.f32.gmra.mrb[0].mxu0 %v381
    %v383 = vpop.f32.mrb[0].mxu0
    %v384 = vadd.f32 %v280, %v383
    %v385 = vpop.f32.mrb[0].mxu0
    %386 = vdwg.mxu0
    %387 = vmatprep.subr.mxu0 0.0
    %v388 = vand.u32 %v24, 4294901760
    %389 = vmatpush1.msra.mxu0 %v388
    %390 = vmatprep.subr.mxu0 0.0
    %v391 = vand.u32 %v25, 4294901760
    %392 = vmatpush1.msra.mxu0 %v391
    %393 = vmatprep.subr.mxu0 0.0
    %v394 = vand.u32 %v26, 4294901760
    %395 = vmatpush1.msra.mxu0 %v394
    %396 = vmatprep.subr.mxu0 0.0
    %v397 = vand.u32 %v27, 4294901760
    %398 = vmatpush1.msra.mxu0 %v397
    %399 = vmatprep.subr.mxu0 0.0
    %v400 = vand.u32 %v28, 4294901760
    %401 = vmatpush1.msra.mxu0 %v400
    %402 = vmatprep.subr.mxu0 0.0
    %v403 = vand.u32 %v29, 4294901760
    %404 = vmatpush1.msra.mxu0 %v403
    %405 = vmatprep.subr.mxu0 0.0
    %v406 = vand.u32 %v30, 4294901760
    %407 = vmatpush1.msra.mxu0 %v406
    %408 = vmatprep.subr.mxu0 0.0
    %v409 = vand.u32 %v31, 4294901760
    %410 = vmatpush1.msra.mxu0 %v409
    %411 = vmatprep.subr.mxu0 0.0
    %v412 = vand.u32 %v32, 4294901760
    %413 = vmatpush1.msra.mxu0 %v412
    %414 = vmatprep.subr.mxu0 0.0
    %v415 = vand.u32 %v33, 4294901760
    %416 = vmatpush1.msra.mxu0 %v415
    %417 = vmatprep.subr.mxu0 0.0
    %v418 = vand.u32 %v34, 4294901760
    %419 = vmatpush1.msra.mxu0 %v418
    %420 = vmatprep.subr.mxu0 0.0
    %v421 = vand.u32 %v35, 4294901760
    %422 = vmatpush1.msra.mxu0 %v421
    %423 = vmatprep.subr.mxu0 0.0
    %v424 = vand.u32 %v36, 4294901760
    %425 = vmatpush1.msra.mxu0 %v424
    %426 = vmatprep.subr.mxu0 0.0
    %v427 = vand.u32 %v37, 4294901760
    %428 = vmatpush1.msra.mxu0 %v427
    %429 = vmatprep.subr.mxu0 0.0
    %v430 = vand.u32 %v38, 4294901760
    %431 = vmatpush1.msra.mxu0 %v430
    %432 = vmatprep.subr.mxu0 0.0
    %v433 = vand.u32 %v39, 4294901760
    %434 = vmatpush1.msra.mxu0 %v433
    %435 = vmatprep.subr.mxu0 0.0
    %436 = vmatpush1.msra.mxu0 0.0
    %437 = vmatprep.subr.mxu0 0.0
    %438 = vmatpush1.msra.mxu0 0.0
    %439 = vmatprep.subr.mxu0 0.0
    %440 = vmatpush1.msra.mxu0 0.0
    %441 = vmatprep.subr.mxu0 0.0
    %442 = vmatpush1.msra.mxu0 0.0
    %443 = vmatprep.subr.mxu0 0.0
    %444 = vmatpush1.msra.mxu0 0.0
    %445 = vmatprep.subr.mxu0 0.0
    %446 = vmatpush1.msra.mxu0 0.0
    %447 = vmatprep.subr.mxu0 0.0
    %448 = vmatpush1.msra.mxu0 0.0
    %449 = vmatprep.subr.mxu0 0.0
    %450 = vmatpush1.msra.mxu0 0.0
    %451 = vmatprep.subr.mxu0 0.0
    %452 = vmatpush1.msra.mxu0 0.0
    %453 = vmatprep.subr.mxu0 0.0
    %454 = vmatpush1.msra.mxu0 0.0
    %455 = vmatprep.subr.mxu0 0.0
    %456 = vmatpush1.msra.mxu0 0.0
    %457 = vmatprep.subr.mxu0 0.0
    %458 = vmatpush1.msra.mxu0 0.0
    %459 = vmatprep.subr.mxu0 0.0
    %460 = vmatpush1.msra.mxu0 0.0
    %461 = vmatprep.subr.mxu0 0.0
    %462 = vmatpush1.msra.mxu0 0.0
    %463 = vmatprep.subr.mxu0 0.0
    %464 = vmatpush1.msra.mxu0 0.0
    %465 = vmatprep.subr.mxu0 0.0
    %466 = vmatpush1.msra.mxu0 0.0
    %467 = vmatprep.mubr.f32.mxu0 0.0
    %v468 = vand.u32 %v23, 4294901760
    %v469 = vsub.f32 %v23, %v468
    %v470 = vand.u32 %v469, 4294901760
    %471 = vmatmul.mubr.f32.gmra.mrb[0].mxu0 %v470
    %v472 = vpop.f32.mrb[0].mxu0
    %v473 = vadd.f32 %v384, %v472
    %v474 = vpop.f32.mrb[0].mxu0
    %475 = vdwg.mxu0
    %476 = vmatprep.subr.mxu0 0.0
    %v477 = vand.u32 %v24, 4294901760
    %v478 = vsub.f32 %v24, %v477
    %v479 = vand.u32 %v478, 4294901760
    %480 = vmatpush1.msra.mxu0 %v479
    %481 = vmatprep.subr.mxu0 0.0
    %v482 = vand.u32 %v25, 4294901760
    %v483 = vsub.f32 %v25, %v482
    %v484 = vand.u32 %v483, 4294901760
    %485 = vmatpush1.msra.mxu0 %v484
    %486 = vmatprep.subr.mxu0 0.0
    %v487 = vand.u32 %v26, 4294901760
    %v488 = vsub.f32 %v26, %v487
    %v489 = vand.u32 %v488, 4294901760
    %490 = vmatpush1.msra.mxu0 %v489
    %491 = vmatprep.subr.mxu0 0.0
    %v492 = vand.u32 %v27, 4294901760
    %v493 = vsub.f32 %v27, %v492
    %v494 = vand.u32 %v493, 4294901760
    %495 = vmatpush1.msra.mxu0 %v494
    %496 = vmatprep.subr.mxu0 0.0
    %v497 = vand.u32 %v28, 4294901760
    %v498 = vsub.f32 %v28, %v497
    %v499 = vand.u32 %v498, 4294901760
    %500 = vmatpush1.msra.mxu0 %v499
    %501 = vmatprep.subr.mxu0 0.0
    %v502 = vand.u32 %v29, 4294901760
    %v503 = vsub.f32 %v29, %v502
    %v504 = vand.u32 %v503, 4294901760
    %505 = vmatpush1.msra.mxu0 %v504
    %506 = vmatprep.subr.mxu0 0.0
    %v507 = vand.u32 %v30, 4294901760
    %v508 = vsub.f32 %v30, %v507
    %v509 = vand.u32 %v508, 4294901760
    %510 = vmatpush1.msra.mxu0 %v509
    %511 = vmatprep.subr.mxu0 0.0
    %v512 = vand.u32 %v31, 4294901760
    %v513 = vsub.f32 %v31, %v512
    %v514 = vand.u32 %v513, 4294901760
    %515 = vmatpush1.msra.mxu0 %v514
    %516 = vmatprep.subr.mxu0 0.0
    %v517 = vand.u32 %v32, 4294901760
    %v518 = vsub.f32 %v32, %v517
    %v519 = vand.u32 %v518, 4294901760
    %520 = vmatpush1.msra.mxu0 %v519
    %521 = vmatprep.subr.mxu0 0.0
    %v522 = vand.u32 %v33, 4294901760
    %v523 = vsub.f32 %v33, %v522
    %v524 = vand.u32 %v523, 4294901760
    %525 = vmatpush1.msra.mxu0 %v524
    %526 = vmatprep.subr.mxu0 0.0
    %v527 = vand.u32 %v34, 4294901760
    %v528 = vsub.f32 %v34, %v527
    %v529 = vand.u32 %v528, 4294901760
    %530 = vmatpush1.msra.mxu0 %v529
    %531 = vmatprep.subr.mxu0 0.0
    %v532 = vand.u32 %v35, 4294901760
    %v533 = vsub.f32 %v35, %v532
    %v534 = vand.u32 %v533, 4294901760
    %535 = vmatpush1.msra.mxu0 %v534
    %536 = vmatprep.subr.mxu0 0.0
    %v537 = vand.u32 %v36, 4294901760
    %v538 = vsub.f32 %v36, %v537
    %v539 = vand.u32 %v538, 4294901760
    %540 = vmatpush1.msra.mxu0 %v539
    %541 = vmatprep.subr.mxu0 0.0
    %v542 = vand.u32 %v37, 4294901760
    %v543 = vsub.f32 %v37, %v542
    %v544 = vand.u32 %v543, 4294901760
    %545 = vmatpush1.msra.mxu0 %v544
    %546 = vmatprep.subr.mxu0 0.0
    %v547 = vand.u32 %v38, 4294901760
    %v548 = vsub.f32 %v38, %v547
    %v549 = vand.u32 %v548, 4294901760
    %550 = vmatpush1.msra.mxu0 %v549
    %551 = vmatprep.subr.mxu0 0.0
    %v552 = vand.u32 %v39, 4294901760
    %v553 = vsub.f32 %v39, %v552
    %v554 = vand.u32 %v553, 4294901760
    %555 = vmatpush1.msra.mxu0 %v554
    %556 = vmatprep.subr.mxu0 0.0
    %557 = vmatpush1.msra.mxu0 0.0
    %558 = vmatprep.subr.mxu0 0.0
    %559 = vmatpush1.msra.mxu0 0.0
    %560 = vmatprep.subr.mxu0 0.0
    %561 = vmatpush1.msra.mxu0 0.0
    %562 = vmatprep.subr.mxu0 0.0
    %563 = vmatpush1.msra.mxu0 0.0
    %564 = vmatprep.subr.mxu0 0.0
    %565 = vmatpush1.msra.mxu0 0.0
    %566 = vmatprep.subr.mxu0 0.0
    %567 = vmatpush1.msra.mxu0 0.0
    %568 = vmatprep.subr.mxu0 0.0
    %569 = vmatpush1.msra.mxu0 0.0
    %570 = vmatprep.subr.mxu0 0.0
    %571 = vmatpush1.msra.mxu0 0.0
    %572 = vmatprep.subr.mxu0 0.0
    %573 = vmatpush1.msra.mxu0 0.0
    %574 = vmatprep.subr.mxu0 0.0
    %575 = vmatpush1.msra.mxu0 0.0
    %576 = vmatprep.subr.mxu0 0.0
    %577 = vmatpush1.msra.mxu0 0.0
    %578 = vmatprep.subr.mxu0 0.0
    %579 = vmatpush1.msra.mxu0 0.0
    %580 = vmatprep.subr.mxu0 0.0
    %581 = vmatpush1.msra.mxu0 0.0
    %582 = vmatprep.subr.mxu0 0.0
    %583 = vmatpush1.msra.mxu0 0.0
    %584 = vmatprep.subr.mxu0 0.0
    %585 = vmatpush1.msra.mxu0 0.0
    %586 = vmatprep.subr.mxu0 0.0
    %587 = vmatpush1.msra.mxu0 0.0
    %588 = vmatprep.mubr.f32.mxu0 0.0
    %v589 = vand.u32 %v23, 4294901760
    %590 = vmatmul.mubr.f32.gmra.mrb[0].mxu0 %v589
    %v591 = vpop.f32.mrb[0].mxu0
    %v592 = vadd.f32 %v473, %v591
    %v593 = vpop.f32.mrb[0].mxu0
    %594 = vdwg.mxu0
    %595 = vmatprep.subr.mxu0 0.0
    %v596 = vand.u32 %v24, 4294901760
    %597 = vmatpush1.msra.mxu0 %v596
    %598 = vmatprep.subr.mxu0 0.0
    %v599 = vand.u32 %v25, 4294901760
    %600 = vmatpush1.msra.mxu0 %v599
    %601 = vmatprep.subr.mxu0 0.0
    %v602 = vand.u32 %v26, 4294901760
    %603 = vmatpush1.msra.mxu0 %v602
    %604 = vmatprep.subr.mxu0 0.0
    %v605 = vand.u32 %v27, 4294901760
    %606 = vmatpush1.msra.mxu0 %v605
    %607 = vmatprep.subr.mxu0 0.0
    %v608 = vand.u32 %v28, 4294901760
    %609 = vmatpush1.msra.mxu0 %v608
    %610 = vmatprep.subr.mxu0 0.0
    %v611 = vand.u32 %v29, 4294901760
    %612 = vmatpush1.msra.mxu0 %v611
    %613 = vmatprep.subr.mxu0 0.0
    %v614 = vand.u32 %v30, 4294901760
    %615 = vmatpush1.msra.mxu0 %v614
    %616 = vmatprep.subr.mxu0 0.0
    %v617 = vand.u32 %v31, 4294901760
    %618 = vmatpush1.msra.mxu0 %v617
    %619 = vmatprep.subr.mxu0 0.0
    %v620 = vand.u32 %v32, 4294901760
    %621 = vmatpush1.msra.mxu0 %v620
    %622 = vmatprep.subr.mxu0 0.0
    %v623 = vand.u32 %v33, 4294901760
    %624 = vmatpush1.msra.mxu0 %v623
    %625 = vmatprep.subr.mxu0 0.0
    %v626 = vand.u32 %v34, 4294901760
    %627 = vmatpush1.msra.mxu0 %v626
    %628 = vmatprep.subr.mxu0 0.0
    %v629 = vand.u32 %v35, 4294901760
    %630 = vmatpush1.msra.mxu0 %v629
    %631 = vmatprep.subr.mxu0 0.0
    %v632 = vand.u32 %v36, 4294901760
    %633 = vmatpush1.msra.mxu0 %v632
    %634 = vmatprep.subr.mxu0 0.0
    %v635 = vand.u32 %v37, 4294901760
    %636 = vmatpush1.msra.mxu0 %v635
    %637 = vmatprep.subr.mxu0 0.0
    %v638 = vand.u32 %v38, 4294901760
    %639 = vmatpush1.msra.mxu0 %v638
    %640 = vmatprep.subr.mxu0 0.0
    %v641 = vand.u32 %v39, 4294901760
    %642 = vmatpush1.msra.mxu0 %v641
    %643 = vmatprep.subr.mxu0 0.0
    %644 = vmatpush1.msra.mxu0 0.0
    %645 = vmatprep.subr.mxu0 0.0
    %646 = vmatpush1.msra.mxu0 0.0
    %647 = vmatprep.subr.mxu0 0.0
    %648 = vmatpush1.msra.mxu0 0.0
    %649 = vmatprep.subr.mxu0 0.0
    %650 = vmatpush1.msra.mxu0 0.0
    %651 = vmatprep.subr.mxu0 0.0
    %652 = vmatpush1.msra.mxu0 0.0
    %653 = vmatprep.subr.mxu0 0.0
    %654 = vmatpush1.msra.mxu0 0.0
    %655 = vmatprep.subr.mxu0 0.0
    %656 = vmatpush1.msra.mxu0 0.0
    %657 = vmatprep.subr.mxu0 0.0
    %658 = vmatpush1.msra.mxu0 0.0
    %659 = vmatprep.subr.mxu0 0.0
    %660 = vmatpush1.msra.mxu0 0.0
    %661 = vmatprep.subr.mxu0 0.0
    %662 = vmatpush1.msra.mxu0 0.0
    %663 = vmatprep.subr.mxu0 0.0
    %664 = vmatpush1.msra.mxu0 0.0
    %665 = vmatprep.subr.mxu0 0.0
    %666 = vmatpush1.msra.mxu0 0.0
    %667 = vmatprep.subr.mxu0 0.0
    %668 = vmatpush1.msra.mxu0 0.0
    %669 = vmatprep.subr.mxu0 0.0
    %670 = vmatpush1.msra.mxu0 0.0
    %671 = vmatprep.subr.mxu0 0.0
    %672 = vmatpush1.msra.mxu0 0.0
    %673 = vmatprep.subr.mxu0 0.0
    %674 = vmatpush1.msra.mxu0 0.0
    %675 = vmatprep.mubr.f32.mxu0 0.0
    %v676 = vand.u32 %v23, 4294901760
    %677 = vmatmul.mubr.f32.gmra.mrb[0].mxu0 %v676
    %v678 = vpop.f32.mrb[0].mxu0
    %v679 = vadd.f32 %v592, %v678
    %v680 = vpop.f32.mrb[0].mxu0
    %681 = vdwg.mxu0
    %v682 = vadd.f32 %v40, %v679
    %683 = vst [vmem:[#allocation2] sm:$0xff] %v682
    // Predicated region
    $region22: #{normed_linear.1} parent=1 // pred_check
      %p684 = pneg %p18
    $region23: #{normed_linear.1} parent=1 // pred_check_branch
      %686 = sbr.rel (%p684) target = $region25
    $region24: #{normed_linear.1} parent=1 // pred_region
      %v687 = vld [vmem:[#allocation2] sm:$0xff]
      %v688 = vld [vmem:[%s2] sm:$0xff]
      %690 = vset.pattern.permute.xlu0 0
      %691 = vperm.xlu0 %690, %v688
      %v692 = vpop.permute.xlu0 %691
      %v694 = vmul.f32 %v687, %v692
      %v695 = vld [vmem:[%s3] sm:$0x1]
      %v697 = vlaneseq
      %v698 = vshrl.u32 %v697, 7
      %v699 = vsub.s32 0, %v698
      %v700 = vrot.slane %v695, %v699
      %v702 = vmul.f32 %v694, %v700
      %703 = vst [vmem:[#allocation2] sm:$0xff] %v702
    $region25: #{normed_linear.1} parent=1 // pred_fallthru
      _
    // Predicated region
    $region26: #{normed_linear.1} parent=1 // pred_check
      _
    $region27: #{normed_linear.1} parent=1 // pred_check_branch
      %705 = sbr.rel (0) target = $region29
    $region28: #{normed_linear.1} parent=1 // pred_region
      %s707 = ssub.s32 128, 128
      %708 = vsyncadd [#allocation3], %s707
      %s710 = sshll.u32 [#allocation2], 4
      %s711 = int_to_ptr.vmem [resolvable:$true] %s710
      %713 = dma.vmem_to_hbm [thread:$0]  %s711, 128, %s4, [#allocation3]
    $region29: #{normed_linear.1} parent=1 // pred_fallthru
      _
    // Predicated region
    $region30: #{normed_linear.1} parent=1 // pred_check
      _
    $region31: #{normed_linear.1} parent=1 // pred_check_branch
      %715 = sbr.rel (0) target = $region33
    $region32: #{normed_linear.1} parent=1 // pred_region
      %716 = dma.done [#allocation3], 128
    $region33: #{normed_linear.1} parent=1 // pred_fallthru
      _
    %717 = vsyncpa [#allocation3], 1

</llo_original>
